<compile_context>
chip_gen: v7x
topology: tpu7x:2x2x1
jax: 0.10.0
libtpu: 0.0.40
codegen_flags: <defaults>
</compile_context>

<pallas_src>
import jax
import jax.numpy as jnp
from jax.experimental import pallas as pl
from jax.experimental.pallas import tpu as pltpu


# ----------------------------------------------------------------- kernel body
def channel_gate_kernel(x_ref, w1_ref, b1_ref, w2_ref, b2_ref, o_ref):
    # x_ref : (1, C, HW)  native dtype
    # w1_ref: (Ch, C)     b1_ref: (Ch, 1)
    # w2_ref: (C, Ch)     b2_ref: (C, 1)
    x = x_ref[0]                                                    # (C, HW)

    # Spatial pooling over the lane axis; accumulate in f32.
    avg = jnp.mean(x, axis=-1, keepdims=True, dtype=jnp.float32)    # (C, 1)
    mx = jnp.max(x, axis=-1, keepdims=True).astype(jnp.float32)     # (C, 1)
    pooled = jnp.concatenate([mx, avg], axis=1)                     # (C, 2)

    # Shared MLP applied to both pooled vectors at once (columns of `pooled`).
    # PyTorch Linear: y = v @ W.T + b  <=>  column form: y_col = W @ v_col + b.
    h = jnp.dot(w1_ref[...], pooled,
                preferred_element_type=jnp.float32) + b1_ref[...]   # (Ch, 2)
    h = jnp.maximum(h, 0.0)                                         # ReLU
    att = jnp.dot(w2_ref[...], h,
                  preferred_element_type=jnp.float32) + b2_ref[...] # (C, 2)

    # channel_att_max + channel_att_avg -> sigmoid -> per-channel scale.
    scale = jax.nn.sigmoid(att[:, 0:1] + att[:, 1:2])               # (C, 1) f32
    o_ref[0] = x * scale.astype(x.dtype)                            # lane broadcast


# ----------------------------------------------------------------- wrapper glue
def channel_gate_forward(x, params):
    B, C, H, W = x.shape
    HW = H * W
    w1 = params["w1"]                    # (Ch, C)
    b1 = params["b1"].reshape(-1, 1)     # (Ch, 1)
    w2 = params["w2"]                    # (C, Ch)
    b2 = params["b2"].reshape(-1, 1)     # (C, 1)
    Ch = w1.shape[0]

    x3 = x.reshape(B, C, HW)             # lane-dense spatial axis
    out3 = pl.pallas_call(
        channel_gate_kernel,
        out_shape=jax.ShapeDtypeStruct((B, C, HW), x.dtype),
        grid=(B,),
        in_specs=[
            pl.BlockSpec((1, C, HW), lambda b: (b, 0, 0)),   # per-batch x block
            pl.BlockSpec((Ch, C), lambda b: (0, 0)),         # weights resident
            pl.BlockSpec((Ch, 1), lambda b: (0, 0)),
            pl.BlockSpec((C, Ch), lambda b: (0, 0)),
            pl.BlockSpec((C, 1), lambda b: (0, 0)),
        ],
        out_specs=pl.BlockSpec((1, C, HW), lambda b: (b, 0, 0)),
        compiler_params=pltpu.CompilerParams(
            dimension_semantics=("parallel",)),              # megacore sharding
    )(x3, w1, b1, w2, b2)
    return out3.reshape(B, C, H, W)


# ----------------------------------------------------------------- params / ref
def make_params(key, C, reduction_ratio=16):
    """Deterministic init matching nn.Linear default (uniform +-1/sqrt(fan_in))."""
    Ch = max(C // reduction_ratio, 1)
    k1, k2, k3, k4 = jax.random.split(key, 4)
    lim1 = 1.0 / (C ** 0.5)
    lim2 = 1.0 / (Ch ** 0.5)
    w1 = jax.random.uniform(k1, (Ch, C), jnp.float32, -lim1, lim1)
    b1 = jax.random.uniform(k2, (Ch,), jnp.float32, -lim1, lim1)
    w2 = jax.random.uniform(k3, (C, Ch), jnp.float32, -lim2, lim2)
    b2 = jax.random.uniform(k4, (C,), jnp.float32, -lim2, lim2)
    return dict(w1=w1, b1=b1, w2=w2, b2=b2)


def channel_gate_ref(x, params):
    """Pure-JAX reference mirroring the PyTorch module."""
    avg = jnp.mean(x, axis=(2, 3))                                  # (B, C)
    mx = jnp.max(x, axis=(2, 3))                                    # (B, C)

    def mlp(v):
        h = jnp.maximum(v @ params["w1"].T + params["b1"], 0.0)
        return h @ params["w2"].T + params["b2"]

    att = mlp(mx) + mlp(avg)
    scale = jax.nn.sigmoid(att)
    return x * scale[:, :, None, None]


# ----------------------------------------------------------------------- main
if __name__ == "__main__":
    key = jax.random.PRNGKey(0)
    kx, kp = jax.random.split(key)

    # gate_channels=32, reduction_ratio=16 -> hidden=2 (matches PyTorch defaults)
    B, C, H, W = 2, 32, 16, 16
    x = jax.random.normal(kx, (B, C, H, W), dtype=jnp.float32)
    params = make_params(kp, C, reduction_ratio=16)

    out = jax.jit(channel_gate_forward)(x, params)
    jax.block_until_ready(out)

    ref = channel_gate_ref(x, params)
    assert out.shape == (B, C, H, W) and out.dtype == x.dtype
    assert jnp.allclose(out, ref, rtol=1e-4, atol=1e-4), "mismatch vs reference"
    print("KERNEL_OK")
</pallas_src>

<mosaic_0001>
module attributes {stable_mosaic.version = 11 : i64} {
  func.func @channel_gate_kernel(%arg0: i32, %arg1: memref<1x32x256xf32, #tpu.memory_space<vmem>>, %arg2: memref<2x32xf32, #tpu.memory_space<vmem>>, %arg3: memref<2x1xf32, #tpu.memory_space<vmem>>, %arg4: memref<32x2xf32, #tpu.memory_space<vmem>>, %arg5: memref<32x1xf32, #tpu.memory_space<vmem>>, %arg6: memref<1x32x256xf32, #tpu.memory_space<vmem>>) attributes {dimension_semantics = [#tpu.dimension_semantics<parallel>], iteration_bounds = array<i64: 2>, scalar_prefetch = 0 : i64, scratch_operands = 0 : i64, tpu.core_type = #tpu.core_type<tc>, window_params = [{transform_indices = @transform_0, window_bounds = array<i64: 1, 32, 256>}, {pipeline_mode = #tpu.pipeline_mode<synchronous>, transform_indices = @transform_1, window_bounds = array<i64: 2, 32>}, {pipeline_mode = #tpu.pipeline_mode<synchronous>, transform_indices = @transform_2, window_bounds = array<i64: 2, 1>}, {pipeline_mode = #tpu.pipeline_mode<synchronous>, transform_indices = @transform_3, window_bounds = array<i64: 32, 2>}, {pipeline_mode = #tpu.pipeline_mode<synchronous>, transform_indices = @transform_4, window_bounds = array<i64: 32, 1>}, {transform_indices = @transform_5, window_bounds = array<i64: 1, 32, 256>}]} {
    %c0 = arith.constant 0 : index
    %c0_0 = arith.constant 0 : index
    %c0_1 = arith.constant 0 : index
    %0 = vector.load %arg1[%c0, %c0_0, %c0_1] : memref<1x32x256xf32, #tpu.memory_space<vmem>>, vector<1x32x256xf32>
    %1 = vector.shape_cast %0 : vector<1x32x256xf32> to vector<32x256xf32>
    %cst = arith.constant dense<0.000000e+00> : vector<32xf32>
    %2 = vector.multi_reduction <add>, %1, %cst [1] : vector<32x256xf32> to vector<32xf32>
    %3 = vector.shape_cast %2 : vector<32xf32> to vector<32x1xf32>
    %cst_2 = arith.constant 2.560000e+02 : f32
    %4 = vector.broadcast %cst_2 : f32 to vector<32x1xf32>
    %5 = arith.divf %3, %4 : vector<32x1xf32>
    %cst_3 = arith.constant dense<0xFF800000> : vector<32xf32>
    %6 = vector.multi_reduction <maximumf>, %1, %cst_3 [1] : vector<32x256xf32> to vector<32xf32>
    %7 = vector.shape_cast %6 : vector<32xf32> to vector<32x1xf32>
    %8 = tpu.concatenate %7, %5 in 1 : vector<32x1xf32>, vector<32x1xf32> -> vector<32x2xf32>
    %c0_4 = arith.constant 0 : index
    %c0_5 = arith.constant 0 : index
    %9 = vector.load %arg2[%c0_4, %c0_5] : memref<2x32xf32, #tpu.memory_space<vmem>>, vector<2x32xf32>
    %cst_6 = arith.constant dense<0.000000e+00> : vector<2x2xf32>
    %10 = tpu.matmul %9, %8, %cst_6 {dimension_numbers = #tpu.dot_dimension_numbers<[1], [0], [0], [1], [0, 0, 1, 1], [], []>} : vector<2x32xf32>, vector<32x2xf32>, vector<2x2xf32> -> vector<2x2xf32>
    %c0_7 = arith.constant 0 : index
    %c0_8 = arith.constant 0 : index
    %11 = vector.load %arg3[%c0_7, %c0_8] : memref<2x1xf32, #tpu.memory_space<vmem>>, vector<2x1xf32>
    %12 = vector.broadcast %11 : vector<2x1xf32> to vector<2x2xf32>
    %13 = arith.addf %10, %12 : vector<2x2xf32>
    %cst_9 = arith.constant 0.000000e+00 : f32
    %14 = vector.broadcast %cst_9 : f32 to vector<2x2xf32>
    %15 = arith.maximumf %13, %14 : vector<2x2xf32>
    %c0_10 = arith.constant 0 : index
    %c0_11 = arith.constant 0 : index
    %16 = vector.load %arg4[%c0_10, %c0_11] : memref<32x2xf32, #tpu.memory_space<vmem>>, vector<32x2xf32>
    %cst_12 = arith.constant dense<0.000000e+00> : vector<32x2xf32>
    %17 = tpu.matmul %16, %15, %cst_12 {dimension_numbers = #tpu.dot_dimension_numbers<[1], [0], [0], [1], [0, 0, 1, 1], [], []>} : vector<32x2xf32>, vector<2x2xf32>, vector<32x2xf32> -> vector<32x2xf32>
    %c0_13 = arith.constant 0 : index
    %c0_14 = arith.constant 0 : index
    %18 = vector.load %arg5[%c0_13, %c0_14] : memref<32x1xf32, #tpu.memory_space<vmem>>, vector<32x1xf32>
    %19 = vector.broadcast %18 : vector<32x1xf32> to vector<32x2xf32>
    %20 = arith.addf %17, %19 : vector<32x2xf32>
    %21 = vector.extract_strided_slice %20 {offsets = [0, 0], sizes = [32, 1], strides = [1, 1]} : vector<32x2xf32> to vector<32x1xf32>
    %22 = vector.extract_strided_slice %20 {offsets = [0, 1], sizes = [32, 1], strides = [1, 1]} : vector<32x2xf32> to vector<32x1xf32>
    %23 = arith.addf %21, %22 : vector<32x1xf32>
    %24 = arith.negf %23 : vector<32x1xf32>
    %25 = math.exp %24 : vector<32x1xf32>
    %cst_15 = arith.constant 1.000000e+00 : f32
    %26 = vector.broadcast %cst_15 : f32 to vector<32x1xf32>
    %27 = arith.addf %26, %25 : vector<32x1xf32>
    %28 = arith.divf %26, %27 : vector<32x1xf32>
    %29 = vector.broadcast %28 : vector<32x1xf32> to vector<32x256xf32>
    %30 = arith.mulf %1, %29 : vector<32x256xf32>
    %c0_16 = arith.constant 0 : index
    %c0_17 = arith.constant 0 : index
    %c0_18 = arith.constant 0 : index
    %31 = vector.load %arg6[%c0_16, %c0_17, %c0_18] : memref<1x32x256xf32, #tpu.memory_space<vmem>>, vector<1x32x256xf32>
    %32 = vector.shape_cast %31 : vector<1x32x256xf32> to vector<32x256xf32>
    %33 = vector.shape_cast %30 : vector<32x256xf32> to vector<1x32x256xf32>
    tpu.vector_store %arg6[%c0_16, %c0_17, %c0_18], %33 {strides = array<i32>} : memref<1x32x256xf32, #tpu.memory_space<vmem>>, vector<1x32x256xf32>,
    return
  }
  func.func @transform_0(%arg0: i32) -> (i32, i32, i32) {
    %c0_i32 = arith.constant 0 : i32
    %c0_i32_0 = arith.constant 0 : i32
    %c0_i32_1 = arith.constant 0 : i32
    return %arg0, %c0_i32, %c0_i32_0 : i32, i32, i32
  }
  func.func @transform_1(%arg0: i32) -> (i32, i32) {
    %c0_i32 = arith.constant 0 : i32
    %c0_i32_0 = arith.constant 0 : i32
    %c0_i32_1 = arith.constant 0 : i32
    return %c0_i32, %c0_i32_0 : i32, i32
  }
  func.func @transform_2(%arg0: i32) -> (i32, i32) {
    %c0_i32 = arith.constant 0 : i32
    %c0_i32_0 = arith.constant 0 : i32
    %c0_i32_1 = arith.constant 0 : i32
    return %c0_i32, %c0_i32_0 : i32, i32
  }
  func.func @transform_3(%arg0: i32) -> (i32, i32) {
    %c0_i32 = arith.constant 0 : i32
    %c0_i32_0 = arith.constant 0 : i32
    %c0_i32_1 = arith.constant 0 : i32
    return %c0_i32, %c0_i32_0 : i32, i32
  }
  func.func @transform_4(%arg0: i32) -> (i32, i32) {
    %c0_i32 = arith.constant 0 : i32
    %c0_i32_0 = arith.constant 0 : i32
    %c0_i32_1 = arith.constant 0 : i32
    return %c0_i32, %c0_i32_0 : i32, i32
  }
  func.func @transform_5(%arg0: i32) -> (i32, i32, i32) {
    %c0_i32 = arith.constant 0 : i32
    %c0_i32_0 = arith.constant 0 : i32
    %c0_i32_1 = arith.constant 0 : i32
    return %arg0, %c0_i32, %c0_i32_0 : i32, i32, i32
  }
}

</mosaic_0001>

<llo_original>
// kernel: channel_gate_forward.1
$region0: #{channel_gate_forward.1}
  #allocation0 [shape = 'u32[]', space=smem, size = 0x4, offset = 0x4, fixed_abs, tag = 'smem constant byte address 0x4 - core index']
  #allocation1 [shape = 'u32[144,128]{1,0:T(1,128)}', space=vmem, size = 0x12000, scoped, tag = 'internal scratch']
  %s0 = inlined_call_operand.vmem [shape: f32[2,32,256], index: 0, kind: input, shape index: {}]
  %s1 = inlined_call_operand.vmem [shape: f32[2,32], index: 1, kind: input, shape index: {}]
  %s2 = inlined_call_operand.vmem [shape: f32[2,1], index: 2, kind: input, shape index: {}]
  %s3 = inlined_call_operand.vmem [shape: f32[32,2], index: 3, kind: input, shape index: {}]
  %s4 = inlined_call_operand.vmem [shape: f32[32,1], index: 4, kind: input, shape index: {}]
  %s5 = inlined_call_operand.vmem [shape: f32[2,32,256], index: 5, kind: output, shape index: {}]
  %s6 = sld [smem:[#allocation0]]
  $region53: #{channel_gate_forward.1} parent=0
    _
  %s8 = ssub.s32 1, %s6
  %s9 = scalar_select 0, %s8, %s6
  loop: start=0, step=1, limit=4
  $region2: #{channel_gate_forward.1} parent=0 // loop_pre_header
    _
  $region3: #{channel_gate_forward.1} parent=0 // loop_header
    %s11 = sphi 0, %s15
    %p12 = scmp.ge.s32.totalorder %s11, 4
    %s21 = sphi 0, %s23
    %s24 = sphi 0, %s21
    %s25 = sphi 0, %s24
    %s41 = sphi 0, %s25
    %s45 = sphi 0, %s45
    %s47 = sphi 0, %s45
    %s48 = sphi 0, %s47
    %s62 = sphi 0, %s48
    %s66 = sphi 0, %s66
    %s68 = sphi 0, %s66
    %s69 = sphi 0, %s68
    %s83 = sphi 0, %s69
    %s87 = sphi 0, %s87
    %s89 = sphi 0, %s87
    %s90 = sphi 0, %s89
    %s104 = sphi 0, %s90
    %s108 = sphi 0, %s108
    %s110 = sphi 0, %s108
    %s111 = sphi 0, %s110
    %s125 = sphi 0, %s111
    %s131 = sphi 0, %s133
    %s134 = sphi 0, %s131
    %s135 = sphi 0, %s134
    %s151 = sphi 0, %s135
  $region4: #{channel_gate_forward.1} parent=0 // loop_header_branch
    %14 = sbr.rel (%p12) target = $region8
  $region5: #{channel_gate_forward.1} parent=0 // loop_body
    %s16 = ssub.s32 %s11, 1
    %s17 = ssub.s32 %s11, 2
    %s18 = sadd.s32 %s11, 1
    %s19 = ssub.s32 %s11, %s18
    %p20 = scmp.eq.s32.totalorder %s19, 0
    %s22 = sadd.s32 %s21, 1
    %s23 = scalar_select %p20, %s21, %s22
    %p26 = pneg %p20
    %p27 = scmp.eq.s32.totalorder %s11, 1
    %p28 = por %p26, %p27
    %p29 = scmp.ne.s32.totalorder %s21, %s24
    %p30 = scmp.eq.s32.totalorder %s11, 0
    %p31 = por %p29, %p30
    %p32 = scmp.ne.s32.totalorder %s21, %s24
    %p33 = scmp.eq.s32.totalorder %s16, 1
    %p34 = por %p32, %p33
    %p35 = scmp.ne.s32.totalorder %s24, %s25
    %p36 = scmp.eq.s32.totalorder %s16, 0
    %p37 = por %p35, %p36
    %p38 = scmp.ne.s32.totalorder %s24, %s25
    %p39 = scmp.eq.s32.totalorder %s17, 1
    %p40 = por %p38, %p39
    %p42 = scmp.ne.s32.totalorder %s25, %s41
    %p43 = scmp.eq.s32.totalorder %s17, 0
    %p44 = por %p42, %p43
    %s46 = sadd.s32 %s45, 1
    %p49 = scmp.eq.s32.totalorder %s11, 1
    %p50 = scmp.ne.s32.totalorder %s45, %s47
    %p51 = scmp.eq.s32.totalorder %s11, 0
    %p52 = por %p50, %p51
    %p53 = scmp.ne.s32.totalorder %s45, %s47
    %p54 = scmp.eq.s32.totalorder %s16, 1
    %p55 = por %p53, %p54
    %p56 = scmp.ne.s32.totalorder %s47, %s48
    %p57 = scmp.eq.s32.totalorder %s16, 0
    %p58 = por %p56, %p57
    %p59 = scmp.ne.s32.totalorder %s47, %s48
    %p60 = scmp.eq.s32.totalorder %s17, 1
    %p61 = por %p59, %p60
    %p63 = scmp.ne.s32.totalorder %s48, %s62
    %p64 = scmp.eq.s32.totalorder %s17, 0
    %p65 = por %p63, %p64
    %s67 = sadd.s32 %s66, 1
    %p70 = scmp.eq.s32.totalorder %s11, 1
    %p71 = scmp.ne.s32.totalorder %s66, %s68
    %p72 = scmp.eq.s32.totalorder %s11, 0
    %p73 = por %p71, %p72
    %p74 = scmp.ne.s32.totalorder %s66, %s68
    %p75 = scmp.eq.s32.totalorder %s16, 1
    %p76 = por %p74, %p75
    %p77 = scmp.ne.s32.totalorder %s68, %s69
    %p78 = scmp.eq.s32.totalorder %s16, 0
    %p79 = por %p77, %p78
    %p80 = scmp.ne.s32.totalorder %s68, %s69
    %p81 = scmp.eq.s32.totalorder %s17, 1
    %p82 = por %p80, %p81
    %p84 = scmp.ne.s32.totalorder %s69, %s83
    %p85 = scmp.eq.s32.totalorder %s17, 0
    %p86 = por %p84, %p85
    %s88 = sadd.s32 %s87, 1
    %p91 = scmp.eq.s32.totalorder %s11, 1
    %p92 = scmp.ne.s32.totalorder %s87, %s89
    %p93 = scmp.eq.s32.totalorder %s11, 0
    %p94 = por %p92, %p93
    %p95 = scmp.ne.s32.totalorder %s87, %s89
    %p96 = scmp.eq.s32.totalorder %s16, 1
    %p97 = por %p95, %p96
    %p98 = scmp.ne.s32.totalorder %s89, %s90
    %p99 = scmp.eq.s32.totalorder %s16, 0
    %p100 = por %p98, %p99
    %p101 = scmp.ne.s32.totalorder %s89, %s90
    %p102 = scmp.eq.s32.totalorder %s17, 1
    %p103 = por %p101, %p102
    %p105 = scmp.ne.s32.totalorder %s90, %s104
    %p106 = scmp.eq.s32.totalorder %s17, 0
    %p107 = por %p105, %p106
    %s109 = sadd.s32 %s108, 1
    %p112 = scmp.eq.s32.totalorder %s11, 1
    %p113 = scmp.ne.s32.totalorder %s108, %s110
    %p114 = scmp.eq.s32.totalorder %s11, 0
    %p115 = por %p113, %p114
    %p116 = scmp.ne.s32.totalorder %s108, %s110
    %p117 = scmp.eq.s32.totalorder %s16, 1
    %p118 = por %p116, %p117
    %p119 = scmp.ne.s32.totalorder %s110, %s111
    %p120 = scmp.eq.s32.totalorder %s16, 0
    %p121 = por %p119, %p120
    %p122 = scmp.ne.s32.totalorder %s110, %s111
    %p123 = scmp.eq.s32.totalorder %s17, 1
    %p124 = por %p122, %p123
    %p126 = scmp.ne.s32.totalorder %s111, %s125
    %p127 = scmp.eq.s32.totalorder %s17, 0
    %p128 = por %p126, %p127
    %s129 = ssub.s32 %s11, %s18
    %p130 = scmp.eq.s32.totalorder %s129, 0
    %s132 = sadd.s32 %s131, 1
    %s133 = scalar_select %p130, %s131, %s132
    %p136 = pneg %p130
    %p137 = scmp.eq.s32.totalorder %s11, 1
    %p138 = por %p136, %p137
    %p139 = scmp.ne.s32.totalorder %s131, %s134
    %p140 = scmp.eq.s32.totalorder %s11, 0
    %p141 = por %p139, %p140
    %p142 = scmp.ne.s32.totalorder %s131, %s134
    %p143 = scmp.eq.s32.totalorder %s16, 1
    %p144 = por %p142, %p143
    %p145 = scmp.ne.s32.totalorder %s134, %s135
    %p146 = scmp.eq.s32.totalorder %s16, 0
    %p147 = por %p145, %p146
    %p148 = scmp.ne.s32.totalorder %s134, %s135
    %p149 = scmp.eq.s32.totalorder %s17, 1
    %p150 = por %p148, %p149
    %p152 = scmp.ne.s32.totalorder %s135, %s151
    %p153 = scmp.eq.s32.totalorder %s17, 0
    %p154 = por %p152, %p153
    %p155 = scmp.le.s32.totalorder 1, %s11
    %p156 = scmp.lt.s32.totalorder %s11, 3
    %p157 = pnand %p155, %p156
    %p158 = pneg %p157
    // Predicated region
    $region9: #{channel_gate_forward.1} parent=5 // pred_check
      _
    $region10: #{channel_gate_forward.1} parent=5 // pred_check_branch
      %160 = sbr.rel (%p157) target = $region12
    $region11: #{channel_gate_forward.1} parent=5 // pred_region
      %s161 = ssub.s32 %s11, 1
      // Predicated region
      $region13: #{channel_gate_forward.1} parent=11 // pred_check
        %p162 = pneg %p58
      $region14: #{channel_gate_forward.1} parent=11 // pred_check_branch
        %164 = sbr.rel (%p162) target = $region16
      $region15: #{channel_gate_forward.1} parent=11 // pred_region
        _
      $region16: #{channel_gate_forward.1} parent=11 // pred_fallthru
        _
      // Predicated region
      $region17: #{channel_gate_forward.1} parent=11 // pred_check
        %p165 = pneg %p79
      $region18: #{channel_gate_forward.1} parent=11 // pred_check_branch
        %167 = sbr.rel (%p165) target = $region20
      $region19: #{channel_gate_forward.1} parent=11 // pred_region
        _
      $region20: #{channel_gate_forward.1} parent=11 // pred_fallthru
        _
      // Predicated region
      $region21: #{channel_gate_forward.1} parent=11 // pred_check
        %p168 = pneg %p100
      $region22: #{channel_gate_forward.1} parent=11 // pred_check_branch
        %170 = sbr.rel (%p168) target = $region24
      $region23: #{channel_gate_forward.1} parent=11 // pred_region
        _
      $region24: #{channel_gate_forward.1} parent=11 // pred_fallthru
        _
      // Predicated region
      $region25: #{channel_gate_forward.1} parent=11 // pred_check
        %p171 = pneg %p121
      $region26: #{channel_gate_forward.1} parent=11 // pred_check_branch
        %173 = sbr.rel (%p171) target = $region28
      $region27: #{channel_gate_forward.1} parent=11 // pred_region
        _
      $region28: #{channel_gate_forward.1} parent=11 // pred_fallthru
        _
    $region12: #{channel_gate_forward.1} parent=5 // pred_fallthru
      _
    %p174 = scmp.lt.s32.totalorder %s11, 2
    // Predicated region
    $region29: #{channel_gate_forward.1} parent=5 // pred_check
      %p175 = pneg %p174
    $region30: #{channel_gate_forward.1} parent=5 // pred_check_branch
      %177 = sbr.rel (%p175) target = $region32
    $region31: #{channel_gate_forward.1} parent=5 // pred_region
      // Predicated region
      $region33: #{channel_gate_forward.1} parent=31 // pred_check
        %p178 = pneg %p31
      $region34: #{channel_gate_forward.1} parent=31 // pred_check_branch
        %180 = sbr.rel (%p178) target = $region36
      $region35: #{channel_gate_forward.1} parent=31 // pred_region
        %p181 = scmp.lt.s32.totalorder %s11, 1
        %s182 = scalar_select %p181, %s11, 1
        %s183 = smul.addr %s182, 8
        %s184 = smul.addr %s183, 8
        %s185 = scalar_lea.vmem %s0, %s184
      $region36: #{channel_gate_forward.1} parent=31 // pred_fallthru
        _
    $region32: #{channel_gate_forward.1} parent=5 // pred_fallthru
      _
    %p186 = scmp.le.s32.totalorder 1, %s11
    %p187 = scmp.lt.s32.totalorder %s11, 3
    %p188 = pnand %p186, %p187
    %p189 = pneg %p188
    // Predicated region
    $region37: #{channel_gate_forward.1} parent=5 // pred_check
      _
    $region38: #{channel_gate_forward.1} parent=5 // pred_check_branch
      %191 = sbr.rel (%p188) target = $region40
    $region39: #{channel_gate_forward.1} parent=5 // pred_region
      %s192 = ssub.s32 %s11, 1
      %p193 = scmp.lt.s32.totalorder %s16, 1
      %s194 = scalar_select %p193, %s16, 1
      %s195 = smul.addr %s194, 8
      %s196 = smul.addr %s195, 8
      %s197 = scalar_lea.vmem %s0, %s196
      %p198 = pneg %p37
      %p199 = pneg %p34
      %p200 = pneg %p58
      %p201 = pneg %p55
      %p202 = pneg %p79
      %p203 = pneg %p76
      %p204 = pneg %p100
      %p205 = pneg %p97
      %p206 = pneg %p121
      %p207 = pneg %p118
      %p208 = pneg %p147
      %p209 = pneg %p144
      %p210 = scmp.lt.s32.totalorder %s16, 1
      %s211 = scalar_select %p210, %s16, 1
      %s212 = smul.addr %s211, 8
      %s213 = smul.addr %s212, 8
      %s214 = scalar_lea.vmem %s5, %s213
      %p215 = scmp.lt.s32.totalorder %s16, 1
      %s216 = scalar_select %p215, %s16, 1
      %s217 = smul.addr %s216, 8
      %s218 = smul.addr %s217, 8
      %s219 = scalar_lea.vmem %s0, %s218
      %p220 = scmp.lt.s32.totalorder %s16, 1
      %s221 = scalar_select %p220, %s16, 1
      %s222 = smul.addr %s221, 8
      %s223 = smul.addr %s222, 8
      %s224 = scalar_lea.vmem %s5, %s223
      %v225 = vld [vmem:[%s219] sm:$0xff]
      %v226 = vld [vmem:[%s219 + $0x8] sm:$0xff]
      %v227 = vld [vmem:[%s219 + $0x10] sm:$0xff]
      %v228 = vld [vmem:[%s219 + $0x18] sm:$0xff]
      %v229 = vld [vmem:[%s219 + $0x20] sm:$0xff]
      %v230 = vld [vmem:[%s219 + $0x28] sm:$0xff]
      %v231 = vld [vmem:[%s219 + $0x30] sm:$0xff]
      %v232 = vld [vmem:[%s219 + $0x38] sm:$0xff]
      %v233 = vadd.f32 %v225, %v226
      %234 = vadd.xlane.f32.xlu0 %v233
      %v235 = vpop.xlane.xlu0 %234
      %v236 = vadd.f32 %v227, %v228
      %237 = vadd.xlane.f32.xlu0 %v236
      %v238 = vpop.xlane.xlu0 %237
      %v239 = vadd.f32 %v229, %v230
      %240 = vadd.xlane.f32.xlu0 %v239
      %v241 = vpop.xlane.xlu0 %240
      %v242 = vadd.f32 %v231, %v232
      %243 = vadd.xlane.f32.xlu0 %v242
      %v244 = vpop.xlane.xlu0 %243
      %v245 = vrcp.pop 256.0
      %v246 = vmul.f32 %v235, %v245
      %v247 = vmul.f32 %v238, %v245
      %v248 = vmul.f32 %v241, %v245
      %v249 = vmul.f32 %v244, %v245
      %v250 = vmax.f32 %v225, %v226
      %251 = vmax.xlane.f32.xlu0 %v250
      %v252 = vpop.xlane.xlu0 %251
      %v253 = vmax.f32 %v227, %v228
      %254 = vmax.xlane.f32.xlu0 %v253
      %v255 = vpop.xlane.xlu0 %254
      %v256 = vmax.f32 %v229, %v230
      %257 = vmax.xlane.f32.xlu0 %v256
      %v258 = vpop.xlane.xlu0 %257
      %v259 = vmax.f32 %v231, %v232
      %260 = vmax.xlane.f32.xlu0 %v259
      %v261 = vpop.xlane.xlu0 %260
      %vm262 = vcmask 7168
      %v263 = vsel %vm262, %v252, %v246
      %v264 = vsel %vm262, %v255, %v247
      %v265 = vsel %vm262, %v258, %v248
      %v266 = vsel %vm262, %v261, %v249
      %v267 = vld [vmem:[%s1] sm:$0x3]
      %v268 = vld [vmem:[%s2] sm:$0x3]
      %270 = vset.pattern.permute.xlu0 0
      %271 = vperm.xlu0 %270, %v268
      %v272 = vpop.permute.xlu0 %271
      %vm274 = vcmask 261120
      %v276 = vsel %vm274, %v267, 0
      %278 = vmatprep.subr.mxu0 0.0
      %279 = vmatpush1.msra.mxu0 %v263
      %280 = vmatprep.subr.mxu0 0.0
      %281 = vmatpush1.msra.mxu0 %v264
      %282 = vmatprep.subr.mxu0 0.0
      %283 = vmatpush1.msra.mxu0 %v265
      %284 = vmatprep.subr.mxu0 0.0
      %285 = vmatpush1.msra.mxu0 %v266
      %286 = vmatprep.subr.mxu0 0.0
      %287 = vmatpush1.msra.mxu0 0.0
      %288 = vmatprep.subr.mxu0 0.0
      %289 = vmatpush1.msra.mxu0 0.0
      %290 = vmatprep.subr.mxu0 0.0
      %291 = vmatpush1.msra.mxu0 0.0
      %292 = vmatprep.subr.mxu0 0.0
      %293 = vmatpush1.msra.mxu0 0.0
      %294 = vmatprep.subr.mxu0 0.0
      %295 = vmatpush1.msra.mxu0 0.0
      %296 = vmatprep.subr.mxu0 0.0
      %297 = vmatpush1.msra.mxu0 0.0
      %298 = vmatprep.subr.mxu0 0.0
      %299 = vmatpush1.msra.mxu0 0.0
      %300 = vmatprep.subr.mxu0 0.0
      %301 = vmatpush1.msra.mxu0 0.0
      %302 = vmatprep.subr.mxu0 0.0
      %303 = vmatpush1.msra.mxu0 0.0
      %304 = vmatprep.subr.mxu0 0.0
      %305 = vmatpush1.msra.mxu0 0.0
      %306 = vmatprep.subr.mxu0 0.0
      %307 = vmatpush1.msra.mxu0 0.0
      %308 = vmatprep.subr.mxu0 0.0
      %309 = vmatpush1.msra.mxu0 0.0
      %310 = vmatprep.subr.mxu0 0.0
      %311 = vmatpush1.msra.mxu0 0.0
      %312 = vmatprep.subr.mxu0 0.0
      %313 = vmatpush1.msra.mxu0 0.0
      %314 = vmatprep.subr.mxu0 0.0
      %315 = vmatpush1.msra.mxu0 0.0
      %316 = vmatprep.subr.mxu0 0.0
      %317 = vmatpush1.msra.mxu0 0.0
      %318 = vmatprep.subr.mxu0 0.0
      %319 = vmatpush1.msra.mxu0 0.0
      %320 = vmatprep.subr.mxu0 0.0
      %321 = vmatpush1.msra.mxu0 0.0
      %322 = vmatprep.subr.mxu0 0.0
      %323 = vmatpush1.msra.mxu0 0.0
      %324 = vmatprep.subr.mxu0 0.0
      %325 = vmatpush1.msra.mxu0 0.0
      %326 = vmatprep.subr.mxu0 0.0
      %327 = vmatpush1.msra.mxu0 0.0
      %328 = vmatprep.subr.mxu0 0.0
      %329 = vmatpush1.msra.mxu0 0.0
      %330 = vmatprep.subr.mxu0 0.0
      %331 = vmatpush1.msra.mxu0 0.0
      %332 = vmatprep.subr.mxu0 0.0
      %333 = vmatpush1.msra.mxu0 0.0
      %334 = vmatprep.subr.mxu0 0.0
      %335 = vmatpush1.msra.mxu0 0.0
      %336 = vmatprep.subr.mxu0 0.0
      %337 = vmatpush1.msra.mxu0 0.0
      %338 = vmatprep.subr.mxu0 0.0
      %339 = vmatpush1.msra.mxu0 0.0
      %340 = vmatprep.subr.mxu0 0.0
      %341 = vmatpush1.msra.mxu0 0.0
      %342 = vmatprep.mubr.f32.mxu0 0.0
      %343 = vmatmul.mubr.f32.gmra.mrb[0].mxu0 %v276
      %v344 = vpop.f32.mrb[0].mxu0
      %v345 = vadd.f32 %v272, %v344
      %v346 = vpop.f32.mrb[0].mxu0
      %347 = vdwg.mxu0
      %v348 = vmax.f32 %v345, 0.0
      %v349 = vld [vmem:[%s3] sm:$0xff]
      %v350 = vld [vmem:[%s3 + $0x8] sm:$0xff]
      %v351 = vld [vmem:[%s3 + $0x10] sm:$0xff]
      %v352 = vld [vmem:[%s3 + $0x18] sm:$0xff]
      %v353 = vld [vmem:[%s4] sm:$0xff]
      %v354 = vld [vmem:[%s4 + $0x8] sm:$0xff]
      %v355 = vld [vmem:[%s4 + $0x10] sm:$0xff]
      %v356 = vld [vmem:[%s4 + $0x18] sm:$0xff]
      %358 = vset.pattern.permute.xlu0 0
      %359 = vperm.xlu0 %358, %v353
      %v360 = vpop.permute.xlu0 %359
      %363 = vset.pattern.permute.xlu0 0
      %364 = vperm.xlu0 %363, %v354
      %v365 = vpop.permute.xlu0 %364
      %368 = vset.pattern.permute.xlu0 0
      %369 = vperm.xlu0 %368, %v355
      %v370 = vpop.permute.xlu0 %369
      %373 = vset.pattern.permute.xlu0 0
      %374 = vperm.xlu0 %373, %v356
      %v375 = vpop.permute.xlu0 %374
      %vm377 = vcmask 15360
      %v379 = vsel %vm377, %v349, 0
      %v382 = vsel %vm377, %v350, 0
      %v385 = vsel %vm377, %v351, 0
      %v388 = vsel %vm377, %v352, 0
      %vm390 = vcmask 1041408
      %v392 = vsel %vm390, %v348, 0
      %394 = vmatprep.subr.mxu0 0.0
      %395 = vmatpush1.msra.mxu0 %v392
      %396 = vmatprep.subr.mxu0 0.0
      %397 = vmatpush1.msra.mxu0 0.0
      %398 = vmatprep.subr.mxu0 0.0
      %399 = vmatpush1.msra.mxu0 0.0
      %400 = vmatprep.subr.mxu0 0.0
      %401 = vmatpush1.msra.mxu0 0.0
      %402 = vmatprep.subr.mxu0 0.0
      %403 = vmatpush1.msra.mxu0 0.0
      %404 = vmatprep.subr.mxu0 0.0
      %405 = vmatpush1.msra.mxu0 0.0
      %406 = vmatprep.subr.mxu0 0.0
      %407 = vmatpush1.msra.mxu0 0.0
      %408 = vmatprep.subr.mxu0 0.0
      %409 = vmatpush1.msra.mxu0 0.0
      %410 = vmatprep.subr.mxu0 0.0
      %411 = vmatpush1.msra.mxu0 0.0
      %412 = vmatprep.subr.mxu0 0.0
      %413 = vmatpush1.msra.mxu0 0.0
      %414 = vmatprep.subr.mxu0 0.0
      %415 = vmatpush1.msra.mxu0 0.0
      %416 = vmatprep.subr.mxu0 0.0
      %417 = vmatpush1.msra.mxu0 0.0
      %418 = vmatprep.subr.mxu0 0.0
      %419 = vmatpush1.msra.mxu0 0.0
      %420 = vmatprep.subr.mxu0 0.0
      %421 = vmatpush1.msra.mxu0 0.0
      %422 = vmatprep.subr.mxu0 0.0
      %423 = vmatpush1.msra.mxu0 0.0
      %424 = vmatprep.subr.mxu0 0.0
      %425 = vmatpush1.msra.mxu0 0.0
      %426 = vmatprep.subr.mxu0 0.0
      %427 = vmatpush1.msra.mxu0 0.0
      %428 = vmatprep.subr.mxu0 0.0
      %429 = vmatpush1.msra.mxu0 0.0
      %430 = vmatprep.subr.mxu0 0.0
      %431 = vmatpush1.msra.mxu0 0.0
      %432 = vmatprep.subr.mxu0 0.0
      %433 = vmatpush1.msra.mxu0 0.0
      %434 = vmatprep.subr.mxu0 0.0
      %435 = vmatpush1.msra.mxu0 0.0
      %436 = vmatprep.subr.mxu0 0.0
      %437 = vmatpush1.msra.mxu0 0.0
      %438 = vmatprep.subr.mxu0 0.0
      %439 = vmatpush1.msra.mxu0 0.0
      %440 = vmatprep.subr.mxu0 0.0
      %441 = vmatpush1.msra.mxu0 0.0
      %442 = vmatprep.subr.mxu0 0.0
      %443 = vmatpush1.msra.mxu0 0.0
      %444 = vmatprep.subr.mxu0 0.0
      %445 = vmatpush1.msra.mxu0 0.0
      %446 = vmatprep.subr.mxu0 0.0
      %447 = vmatpush1.msra.mxu0 0.0
      %448 = vmatprep.subr.mxu0 0.0
      %449 = vmatpush1.msra.mxu0 0.0
      %450 = vmatprep.subr.mxu0 0.0
      %451 = vmatpush1.msra.mxu0 0.0
      %452 = vmatprep.subr.mxu0 0.0
      %453 = vmatpush1.msra.mxu0 0.0
      %454 = vmatprep.subr.mxu0 0.0
      %455 = vmatpush1.msra.mxu0 0.0
      %456 = vmatprep.subr.mxu0 0.0
      %457 = vmatpush1.msra.mxu0 0.0
      %458 = vmatprep.mubr.f32.mxu0 0.0
      %459 = vmatmul.mubr.f32.gmra.mrb[0].mxu0 %v379
      %v460 = vpop.f32.mrb[0].mxu0
      %v461 = vadd.f32 %v360, %v460
      %v462 = vpop.f32.mrb[0].mxu0
      %463 = vmatprep.mubr.f32.mxu0 0.0
      %464 = vmatmul.mubr.f32.gmra.mrb[0].mxu0 %v382
      %v465 = vpop.f32.mrb[0].mxu0
      %v466 = vadd.f32 %v365, %v465
      %v467 = vpop.f32.mrb[0].mxu0
      %468 = vmatprep.mubr.f32.mxu0 0.0
      %469 = vmatmul.mubr.f32.gmra.mrb[0].mxu0 %v385
      %v470 = vpop.f32.mrb[0].mxu0
      %v471 = vadd.f32 %v370, %v470
      %v472 = vpop.f32.mrb[0].mxu0
      %473 = vmatprep.mubr.f32.mxu0 0.0
      %474 = vmatmul.mubr.f32.gmra.mrb[0].mxu0 %v388
      %v475 = vpop.f32.mrb[0].mxu0
      %v476 = vadd.f32 %v375, %v475
      %v477 = vpop.f32.mrb[0].mxu0
      %478 = vdwg.mxu0
      %483 = vrot.lane.b32.xlu0 %v461, 127
      %v484 = vpop.permute.xlu0 %483
      %485 = vrot.lane.b32.xlu0 %v466, 127
      %v486 = vpop.permute.xlu0 %485
      %487 = vrot.lane.b32.xlu0 %v471, 127
      %v488 = vpop.permute.xlu0 %487
      %489 = vrot.lane.b32.xlu0 %v476, 127
      %v490 = vpop.permute.xlu0 %489
      %v495 = vadd.f32 %v461, %v484
      %v496 = vadd.f32 %v466, %v486
      %v497 = vadd.f32 %v471, %v488
      %v498 = vadd.f32 %v476, %v490
      %v499 = vxor.u32 %v495, 2147483648
      %v500 = vxor.u32 %v496, 2147483648
      %v501 = vxor.u32 %v497, 2147483648
      %v502 = vxor.u32 %v498, 2147483648
      %v503 = vmul.f32 %v499, 1.442695
      %v504 = vpow.pop %v503
      %v505 = vmul.f32 %v500, 1.442695
      %v506 = vpow.pop %v505
      %v507 = vmul.f32 %v501, 1.442695
      %v508 = vpow.pop %v507
      %v509 = vmul.f32 %v502, 1.442695
      %v510 = vpow.pop %v509
      %v511 = vadd.f32 %v504, 1.0
      %v512 = vadd.f32 %v506, 1.0
      %v513 = vadd.f32 %v508, 1.0
      %v514 = vadd.f32 %v510, 1.0
      %v515 = vrcp.pop %v511
      %v516 = vmul.f32 1.0, %v515
      %v517 = vrcp.pop %v512
      %v518 = vmul.f32 1.0, %v517
      %v519 = vrcp.pop %v513
      %v520 = vmul.f32 1.0, %v519
      %v521 = vrcp.pop %v514
      %v522 = vmul.f32 1.0, %v521
      %524 = vset.pattern.permute.xlu0 0
      %525 = vperm.xlu0 %524, %v516
      %v526 = vpop.permute.xlu0 %525
      %529 = vset.pattern.permute.xlu0 0
      %530 = vperm.xlu0 %529, %v518
      %v531 = vpop.permute.xlu0 %530
      %534 = vset.pattern.permute.xlu0 0
      %535 = vperm.xlu0 %534, %v520
      %v536 = vpop.permute.xlu0 %535
      %539 = vset.pattern.permute.xlu0 0
      %540 = vperm.xlu0 %539, %v522
      %v541 = vpop.permute.xlu0 %540
      %v543 = vmul.f32 %v225, %v526
      %v544 = vmul.f32 %v226, %v526
      %v545 = vmul.f32 %v227, %v531
      %v546 = vmul.f32 %v228, %v531
      %v547 = vmul.f32 %v229, %v536
      %v548 = vmul.f32 %v230, %v536
      %v549 = vmul.f32 %v231, %v541
      %v550 = vmul.f32 %v232, %v541
      %551 = vst [vmem:[%s224] sm:$0xff] %v543
      %552 = vst [vmem:[%s224 + $0x8] sm:$0xff] %v544
      %553 = vst [vmem:[%s224 + $0x10] sm:$0xff] %v545
      %554 = vst [vmem:[%s224 + $0x18] sm:$0xff] %v546
      %555 = vst [vmem:[%s224 + $0x20] sm:$0xff] %v547
      %556 = vst [vmem:[%s224 + $0x28] sm:$0xff] %v548
      %557 = vst [vmem:[%s224 + $0x30] sm:$0xff] %v549
      %558 = vst [vmem:[%s224 + $0x38] sm:$0xff] %v550
      %p559 = scmp.lt.s32.totalorder %s16, 1
      %s560 = scalar_select %p559, %s16, 1
      %s561 = smul.addr %s560, 8
      %s562 = smul.addr %s561, 8
      %s563 = scalar_lea.vmem %s5, %s562
      // Predicated region
      $region41: #{channel_gate_forward.1} parent=39 // pred_check
        %p564 = pneg %p144
      $region42: #{channel_gate_forward.1} parent=39 // pred_check_branch
        %566 = sbr.rel (%p564) target = $region44
      $region43: #{channel_gate_forward.1} parent=39 // pred_region
        _
      $region44: #{channel_gate_forward.1} parent=39 // pred_fallthru
        _
    $region40: #{channel_gate_forward.1} parent=5 // pred_fallthru
      _
    %p567 = scmp.le.s32.totalorder 2, %s11
    // Predicated region
    $region45: #{channel_gate_forward.1} parent=5 // pred_check
      %p568 = pneg %p567
    $region46: #{channel_gate_forward.1} parent=5 // pred_check_branch
      %570 = sbr.rel (%p568) target = $region48
    $region47: #{channel_gate_forward.1} parent=5 // pred_region
      %s571 = ssub.s32 %s11, 2
      // Predicated region
      $region49: #{channel_gate_forward.1} parent=47 // pred_check
        %p572 = pneg %p150
      $region50: #{channel_gate_forward.1} parent=47 // pred_check_branch
        %574 = sbr.rel (%p572) target = $region52
      $region51: #{channel_gate_forward.1} parent=47 // pred_region
        %p575 = scmp.lt.s32.totalorder %s17, 1
        %s576 = scalar_select %p575, %s17, 1
        %s577 = smul.addr %s576, 8
        %s578 = smul.addr %s577, 8
        %s579 = scalar_lea.vmem %s5, %s578
      $region52: #{channel_gate_forward.1} parent=47 // pred_fallthru
        _
    $region48: #{channel_gate_forward.1} parent=5 // pred_fallthru
      _
  $region6: #{channel_gate_forward.1} parent=0 // loop_footer
    %s15 = sadd.s32 1, %s11
  $region7: #{channel_gate_forward.1} parent=0 // loop_footer_branch
    %10 = sbr.rel target = $region3
  $region8: #{channel_gate_forward.1} parent=0 // loop_exit
    _

</llo_original>
